<compile_context>
chip_gen: v6e
topology: v6e:2x2x1
jax: 0.10.0
libtpu: 0.0.40
codegen_flags: <defaults>
</compile_context>

<pallas_src>
import jax
import jax.numpy as jnp
from jax.experimental import pallas as pl
from jax.experimental.pallas import tpu as pltpu


def _round_up(n, m):
    return ((n + m - 1) // m) * m


def _ffnn_kernel(x_ref, w1_ref, b1_ref, w2_ref, b2_ref, w3_ref, b3_ref, outT_ref):
    """One batch tile: x (Bt, D) f32 -> logits^T (C, Bt) f32, all layers fused."""
    # In-kernel layout work: VPU cast + XLU transpose overlap the (dominant) x DMA.
    xT = x_ref[...].astype(jnp.bfloat16).T                               # (D, Bt) bf16

    # Layer 1: bf16 x bf16 on the MXU, f32 accumulation; N = Bt is lane-dense.
    h1 = jnp.dot(w1_ref[...], xT, preferred_element_type=jnp.float32)    # (64, Bt)
    h1 = jnp.maximum(h1 + b1_ref[...], 0.0).astype(jnp.bfloat16)         # bf16 -> single-pass MXU

    h2 = jnp.dot(w2_ref[...], h1, preferred_element_type=jnp.float32)    # (32, Bt)
    h2 = jnp.maximum(h2 + b2_ref[...], 0.0).astype(jnp.bfloat16)

    out = jnp.dot(w3_ref[...], h2, preferred_element_type=jnp.float32)   # (C, Bt)
    outT_ref[...] = (out + b3_ref[...]).astype(outT_ref.dtype)


def ffnn_forward(x, params, *, block_b=16384):
    """Fused FFNN forward pass.

    x:      (B, input_size) float32 (consumed as-is, no copies)
    params: PyTorch nn.Linear layout --
            w1 (64, input_size), b1 (64,), w2 (32, 64), b2 (32,),
            w3 (num_classes, 32), b3 (num_classes,)
    Returns logits of shape (B, num_classes), float32.
    """
    B, D = x.shape
    w1, b1, w2, b2, w3, b3 = (params[k] for k in ("w1", "b1", "w2", "b2", "w3", "b3"))
    C = w3.shape[0]

    # Multiple of 128 keeps the batch/lane axis of all activations and the
    # output tile dense; the MXU is limited by M=64 / K=32, not N, so no need
    # for a 256 multiple.  Shrink the tile for small batches.
    assert block_b % 128 == 0 and block_b >= 128
    bb = min(block_b, _round_up(B, 128))
    n_tiles = pl.cdiv(B, bb)          # ragged last tile handled by clamped DMAs

    # One-time, parameter-sized prep (a few KiB; not x-proportional).
    w1c, w2c, w3c = (w.astype(jnp.bfloat16) for w in (w1, w2, w3))
    b1c, b2c, b3c = (b.astype(jnp.float32).reshape(-1, 1) for b in (b1, b2, b3))

    def resident(shape):
        # Constant block index: Pallas keeps the tiny weight/bias tiles resident
        # in VMEM across grid steps (no re-DMA).
        return pl.BlockSpec(shape, lambda i: (0, 0))

    outT = pl.pallas_call(
        _ffnn_kernel,
        out_shape=jax.ShapeDtypeStruct((C, B), jnp.float32),
        grid_spec=pltpu.PrefetchScalarGridSpec(
            num_scalar_prefetch=0,
            grid=(n_tiles,),
            in_specs=[
                # x in natural (B, D) layout: contiguous 128 B/row HBM reads.
                pl.BlockSpec((bb, D), lambda i: (i, 0)),
                resident(w1c.shape), resident(b1c.shape),
                resident(w2c.shape), resident(b2c.shape),
                resident(w3c.shape), resident(b3c.shape),
            ],
            # Lane-dense output tile: unmasked full-width stores even with C=4.
            out_specs=pl.BlockSpec((C, bb), lambda i: (0, i)),
        ),
        compiler_params=pltpu.CompilerParams(
            # Independent batch tiles: pipelined everywhere, megacore-sharded on v7x.
            dimension_semantics=("parallel",),
            # Headroom above v5e's 16 MiB scoped default; still < v7x's 64 MiB physical.
            vmem_limit_bytes=40 * 1024 * 1024,
        ),
    )(x, w1c, b1c, w2c, b2c, w3c, b3c)

    # Tiny (4, B) -> (B, 4) relayout; deliberately cheaper than masked in-kernel
    # stores into a 32x lane-padded (block_b, 4) VMEM tile (see header comment).
    return outT.T


def init_params(key, input_size, num_classes):
    """Deterministic init mimicking nn.Linear's uniform(+-1/sqrt(fan_in)),
    stored in PyTorch's native (out, in) layout."""
    def linear(key, fan_in, fan_out):
        kw, kb = jax.random.split(key)
        bound = 1.0 / jnp.sqrt(jnp.float32(fan_in))
        w = jax.random.uniform(kw, (fan_out, fan_in), jnp.float32, -bound, bound)
        b = jax.random.uniform(kb, (fan_out,), jnp.float32, -bound, bound)
        return w, b

    k1, k2, k3 = jax.random.split(key, 3)
    w1, b1 = linear(k1, input_size, 64)
    w2, b2 = linear(k2, 64, 32)
    w3, b3 = linear(k3, 32, num_classes)
    return {"w1": w1, "b1": b1, "w2": w2, "b2": b2, "w3": w3, "b3": b3}


def _reference(x, p):
    h1 = jnp.maximum(x @ p["w1"].T + p["b1"], 0.0)
    h2 = jnp.maximum(h1 @ p["w2"].T + p["b2"], 0.0)
    return h2 @ p["w3"].T + p["b3"]


if __name__ == "__main__":
    input_size = 32
    num_classes = 4

    key = jax.random.PRNGKey(0)
    kx_small, kx_big, kp = jax.random.split(key, 3)
    params = init_params(kp, input_size, num_classes)

    # Small batch: single tile (shrunk to 128 rows), clamped DMAs pad the tail.
    x_small = jax.random.normal(kx_small, (8, input_size), jnp.float32)
    out_small = jax.block_until_ready(ffnn_forward(x_small, params))
    ref_small = _reference(x_small, params)
    assert out_small.shape == (8, num_classes)
    assert jnp.allclose(out_small, ref_small, atol=5e-2, rtol=5e-2), (
        "small-batch mismatch vs reference")

    # Ragged multi-tile grid (grid=4, last tile partially out of bounds):
    # exercises the pipelined path and the clamped last-tile handling.
    x_big = jax.random.normal(kx_big, (1000, input_size), jnp.float32)
    out_big = jax.block_until_ready(ffnn_forward(x_big, params, block_b=256))
    ref_big = _reference(x_big, params)
    assert out_big.shape == (1000, num_classes)
    assert jnp.allclose(out_big, ref_big, atol=5e-2, rtol=5e-2), (
        "ragged-batch mismatch vs reference")

    print("KERNEL_OK")
</pallas_src>

<mosaic_0001>
module attributes {stable_mosaic.version = 11 : i64} {
  func.func @_ffnn_kernel(%arg0: i32, %arg1: memref<128x32xf32, #tpu.memory_space<vmem>>, %arg2: memref<64x32xbf16, #tpu.memory_space<vmem>>, %arg3: memref<64x1xf32, #tpu.memory_space<vmem>>, %arg4: memref<32x64xbf16, #tpu.memory_space<vmem>>, %arg5: memref<32x1xf32, #tpu.memory_space<vmem>>, %arg6: memref<4x32xbf16, #tpu.memory_space<vmem>>, %arg7: memref<4x1xf32, #tpu.memory_space<vmem>>, %arg8: memref<4x128xf32, #tpu.memory_space<vmem>>) attributes {dimension_semantics = [#tpu.dimension_semantics<parallel>], iteration_bounds = array<i64: 1>, scalar_prefetch = 0 : i64, scratch_operands = 0 : i64, tpu.core_type = #tpu.core_type<tc>, window_params = [{transform_indices = @transform_0, window_bounds = array<i64: 128, 32>}, {pipeline_mode = #tpu.pipeline_mode<synchronous>, transform_indices = @transform_1, window_bounds = array<i64: 64, 32>}, {pipeline_mode = #tpu.pipeline_mode<synchronous>, transform_indices = @transform_2, window_bounds = array<i64: 64, 1>}, {pipeline_mode = #tpu.pipeline_mode<synchronous>, transform_indices = @transform_3, window_bounds = array<i64: 32, 64>}, {pipeline_mode = #tpu.pipeline_mode<synchronous>, transform_indices = @transform_4, window_bounds = array<i64: 32, 1>}, {pipeline_mode = #tpu.pipeline_mode<synchronous>, transform_indices = @transform_5, window_bounds = array<i64: 4, 32>}, {pipeline_mode = #tpu.pipeline_mode<synchronous>, transform_indices = @transform_6, window_bounds = array<i64: 4, 1>}, {transform_indices = @transform_7, window_bounds = array<i64: 4, 128>}]} {
    %c0 = arith.constant 0 : index
    %c0_0 = arith.constant 0 : index
    %0 = vector.load %arg1[%c0, %c0_0] : memref<128x32xf32, #tpu.memory_space<vmem>>, vector<128x32xf32>
    %1 = arith.truncf %0 : vector<128x32xf32> to vector<128x32xbf16>
    %2 = tpu.transpose %1, [1, 0] : vector<128x32xbf16> -> vector<32x128xbf16>
    %c0_1 = arith.constant 0 : index
    %c0_2 = arith.constant 0 : index
    %3 = vector.load %arg2[%c0_1, %c0_2] : memref<64x32xbf16, #tpu.memory_space<vmem>>, vector<64x32xbf16>
    %cst = arith.constant dense<0.000000e+00> : vector<64x128xf32>
    %4 = tpu.matmul %3, %2, %cst {dimension_numbers = #tpu.dot_dimension_numbers<[1], [0], [0], [1], [0, 0, 1, 1], [], []>} : vector<64x32xbf16>, vector<32x128xbf16>, vector<64x128xf32> -> vector<64x128xf32>
    %c0_3 = arith.constant 0 : index
    %c0_4 = arith.constant 0 : index
    %5 = vector.load %arg3[%c0_3, %c0_4] : memref<64x1xf32, #tpu.memory_space<vmem>>, vector<64x1xf32>
    %6 = vector.broadcast %5 : vector<64x1xf32> to vector<64x128xf32>
    %7 = arith.addf %4, %6 : vector<64x128xf32>
    %cst_5 = arith.constant 0.000000e+00 : f32
    %8 = vector.broadcast %cst_5 : f32 to vector<64x128xf32>
    %9 = arith.maximumf %7, %8 : vector<64x128xf32>
    %10 = arith.truncf %9 : vector<64x128xf32> to vector<64x128xbf16>
    %c0_6 = arith.constant 0 : index
    %c0_7 = arith.constant 0 : index
    %11 = vector.load %arg4[%c0_6, %c0_7] : memref<32x64xbf16, #tpu.memory_space<vmem>>, vector<32x64xbf16>
    %cst_8 = arith.constant dense<0.000000e+00> : vector<32x128xf32>
    %12 = tpu.matmul %11, %10, %cst_8 {dimension_numbers = #tpu.dot_dimension_numbers<[1], [0], [0], [1], [0, 0, 1, 1], [], []>} : vector<32x64xbf16>, vector<64x128xbf16>, vector<32x128xf32> -> vector<32x128xf32>
    %c0_9 = arith.constant 0 : index
    %c0_10 = arith.constant 0 : index
    %13 = vector.load %arg5[%c0_9, %c0_10] : memref<32x1xf32, #tpu.memory_space<vmem>>, vector<32x1xf32>
    %14 = vector.broadcast %13 : vector<32x1xf32> to vector<32x128xf32>
    %15 = arith.addf %12, %14 : vector<32x128xf32>
    %cst_11 = arith.constant 0.000000e+00 : f32
    %16 = vector.broadcast %cst_11 : f32 to vector<32x128xf32>
    %17 = arith.maximumf %15, %16 : vector<32x128xf32>
    %18 = arith.truncf %17 : vector<32x128xf32> to vector<32x128xbf16>
    %c0_12 = arith.constant 0 : index
    %c0_13 = arith.constant 0 : index
    %19 = vector.load %arg6[%c0_12, %c0_13] : memref<4x32xbf16, #tpu.memory_space<vmem>>, vector<4x32xbf16>
    %cst_14 = arith.constant dense<0.000000e+00> : vector<4x128xf32>
    %20 = tpu.matmul %19, %18, %cst_14 {dimension_numbers = #tpu.dot_dimension_numbers<[1], [0], [0], [1], [0, 0, 1, 1], [], []>} : vector<4x32xbf16>, vector<32x128xbf16>, vector<4x128xf32> -> vector<4x128xf32>
    %c0_15 = arith.constant 0 : index
    %c0_16 = arith.constant 0 : index
    %21 = vector.load %arg7[%c0_15, %c0_16] : memref<4x1xf32, #tpu.memory_space<vmem>>, vector<4x1xf32>
    %22 = vector.broadcast %21 : vector<4x1xf32> to vector<4x128xf32>
    %23 = arith.addf %20, %22 : vector<4x128xf32>
    %c0_17 = arith.constant 0 : index
    %c0_18 = arith.constant 0 : index
    %24 = vector.load %arg8[%c0_17, %c0_18] : memref<4x128xf32, #tpu.memory_space<vmem>>, vector<4x128xf32>
    tpu.vector_store %arg8[%c0_17, %c0_18], %23 {strides = array<i32>} : memref<4x128xf32, #tpu.memory_space<vmem>>, vector<4x128xf32>,
    return
  }
  func.func @transform_0(%arg0: i32) -> (i32, i32) {
    %c0_i32 = arith.constant 0 : i32
    %c0_i32_0 = arith.constant 0 : i32
    return %arg0, %c0_i32 : i32, i32
  }
  func.func @transform_1(%arg0: i32) -> (i32, i32) {
    %c0_i32 = arith.constant 0 : i32
    %c0_i32_0 = arith.constant 0 : i32
    %c0_i32_1 = arith.constant 0 : i32
    return %c0_i32, %c0_i32_0 : i32, i32
  }
  func.func @transform_2(%arg0: i32) -> (i32, i32) {
    %c0_i32 = arith.constant 0 : i32
    %c0_i32_0 = arith.constant 0 : i32
    %c0_i32_1 = arith.constant 0 : i32
    return %c0_i32, %c0_i32_0 : i32, i32
  }
  func.func @transform_3(%arg0: i32) -> (i32, i32) {
    %c0_i32 = arith.constant 0 : i32
    %c0_i32_0 = arith.constant 0 : i32
    %c0_i32_1 = arith.constant 0 : i32
    return %c0_i32, %c0_i32_0 : i32, i32
  }
  func.func @transform_4(%arg0: i32) -> (i32, i32) {
    %c0_i32 = arith.constant 0 : i32
    %c0_i32_0 = arith.constant 0 : i32
    %c0_i32_1 = arith.constant 0 : i32
    return %c0_i32, %c0_i32_0 : i32, i32
  }
  func.func @transform_5(%arg0: i32) -> (i32, i32) {
    %c0_i32 = arith.constant 0 : i32
    %c0_i32_0 = arith.constant 0 : i32
    %c0_i32_1 = arith.constant 0 : i32
    return %c0_i32, %c0_i32_0 : i32, i32
  }
  func.func @transform_6(%arg0: i32) -> (i32, i32) {
    %c0_i32 = arith.constant 0 : i32
    %c0_i32_0 = arith.constant 0 : i32
    %c0_i32_1 = arith.constant 0 : i32
    return %c0_i32, %c0_i32_0 : i32, i32
  }
  func.func @transform_7(%arg0: i32) -> (i32, i32) {
    %c0_i32 = arith.constant 0 : i32
    %c0_i32_0 = arith.constant 0 : i32
    return %c0_i32, %arg0 : i32, i32
  }
}

</mosaic_0001>

<llo_original>
// kernel: tpu_custom_call.1
$region0: #{tpu_custom_call.1}
  #allocation0 [shape = 'u32[]', space=smem, size = 0x4, offset = 0x4, fixed_abs, tag = 'smem constant byte address 0x4 - core index']
  #allocation1 [shape = 'u32[144,128]{1,0:T(1,128)}', space=vmem, size = 0x12000, scoped, tag = 'internal scratch']
  %s0 = inlined_call_operand.vmem [shape: f32[8,32], index: 0, kind: input, shape index: {}]
  %s1 = inlined_call_operand.vmem [shape: bf16[64,32], index: 1, kind: input, shape index: {}]
  %s2 = inlined_call_operand.vmem [shape: f32[64,1], index: 2, kind: input, shape index: {}]
  %s3 = inlined_call_operand.vmem [shape: bf16[32,64], index: 3, kind: input, shape index: {}]
  %s4 = inlined_call_operand.vmem [shape: f32[32,1], index: 4, kind: input, shape index: {}]
  %s5 = inlined_call_operand.vmem [shape: bf16[4,32], index: 5, kind: input, shape index: {}]
  %s6 = inlined_call_operand.vmem [shape: f32[4,1], index: 6, kind: input, shape index: {}]
  %s7 = inlined_call_operand.hbm [shape: f32[4,8], index: 7, kind: output, shape index: {}]
  %s8 = sld [smem:[#allocation0]]
  $region38: #{tpu_custom_call.1} parent=0
    _
  %s10 = ssub.s32 1, %s8
  %s11 = scalar_select 0, %s10, %s8
  $region1: #{tpu_custom_call.1} parent=0
    #allocation2 [shape = 'u8[2048]{0}', space=vmem, size = 0x800, scoped, tag = 'output window, operand 0, single buffered']
    #allocation3 [shape = 's32[1]{0}', space=sflag, size = 0x4, scoped, tag = 'scoped memory for tpu_custom_call.1']
    %12 = vsyncpa [#allocation3], 0
    // Predicated region
    $region2: #{tpu_custom_call.1} parent=1 // pred_check
      _
    $region3: #{tpu_custom_call.1} parent=1 // pred_check_branch
      %14 = sbr.rel (0) target = $region5
    $region4: #{tpu_custom_call.1} parent=1 // pred_region
      _
    $region5: #{tpu_custom_call.1} parent=1 // pred_fallthru
      _
    // Predicated region
    $region6: #{tpu_custom_call.1} parent=1 // pred_check
      _
    $region7: #{tpu_custom_call.1} parent=1 // pred_check_branch
      %16 = sbr.rel (0) target = $region9
    $region8: #{tpu_custom_call.1} parent=1 // pred_region
      _
    $region9: #{tpu_custom_call.1} parent=1 // pred_fallthru
      _
    // Predicated region
    $region10: #{tpu_custom_call.1} parent=1 // pred_check
      _
    $region11: #{tpu_custom_call.1} parent=1 // pred_check_branch
      %18 = sbr.rel (0) target = $region13
    $region12: #{tpu_custom_call.1} parent=1 // pred_region
      _
    $region13: #{tpu_custom_call.1} parent=1 // pred_fallthru
      _
    // Predicated region
    $region14: #{tpu_custom_call.1} parent=1 // pred_check
      _
    $region15: #{tpu_custom_call.1} parent=1 // pred_check_branch
      %20 = sbr.rel (0) target = $region17
    $region16: #{tpu_custom_call.1} parent=1 // pred_region
      _
    $region17: #{tpu_custom_call.1} parent=1 // pred_fallthru
      _
    // Predicated region
    $region18: #{tpu_custom_call.1} parent=1 // pred_check
      _
    $region19: #{tpu_custom_call.1} parent=1 // pred_check_branch
      %22 = sbr.rel (0) target = $region21
    $region20: #{tpu_custom_call.1} parent=1 // pred_region
      _
    $region21: #{tpu_custom_call.1} parent=1 // pred_fallthru
      _
    // Predicated region
    $region22: #{tpu_custom_call.1} parent=1 // pred_check
      _
    $region23: #{tpu_custom_call.1} parent=1 // pred_check_branch
      %24 = sbr.rel (0) target = $region25
    $region24: #{tpu_custom_call.1} parent=1 // pred_region
      _
    $region25: #{tpu_custom_call.1} parent=1 // pred_fallthru
      _
    // Predicated region
    $region26: #{tpu_custom_call.1} parent=1 // pred_check
      _
    $region27: #{tpu_custom_call.1} parent=1 // pred_check_branch
      %26 = sbr.rel (0) target = $region29
    $region28: #{tpu_custom_call.1} parent=1 // pred_region
      _
    $region29: #{tpu_custom_call.1} parent=1 // pred_fallthru
      _
    %v28 = vld [vmem:[%s0] sm:$0xff]
    %v29 = vld [vmem:[%s0 + $0x8] sm:$0xff]
    %v30 = vld [vmem:[%s0 + $0x10] sm:$0xff]
    %v31 = vld [vmem:[%s0 + $0x18] sm:$0xff]
    %v32 = vld [vmem:[%s0 + $0x20] sm:$0xff]
    %v33 = vld [vmem:[%s0 + $0x28] sm:$0xff]
    %v34 = vld [vmem:[%s0 + $0x30] sm:$0xff]
    %v35 = vld [vmem:[%s0 + $0x38] sm:$0xff]
    %v36 = vld [vmem:[%s0 + $0x40] sm:$0xff]
    %v37 = vld [vmem:[%s0 + $0x48] sm:$0xff]
    %v38 = vld [vmem:[%s0 + $0x50] sm:$0xff]
    %v39 = vld [vmem:[%s0 + $0x58] sm:$0xff]
    %v40 = vld [vmem:[%s0 + $0x60] sm:$0xff]
    %v41 = vld [vmem:[%s0 + $0x68] sm:$0xff]
    %v42 = vld [vmem:[%s0 + $0x70] sm:$0xff]
    %v43 = vld [vmem:[%s0 + $0x78] sm:$0xff]
    %v44 = vpack.c.bf16 %v29, %v28
    %v45 = vpack.c.bf16 %v31, %v30
    %v46 = vpack.c.bf16 %v33, %v32
    %v47 = vpack.c.bf16 %v35, %v34
    %v48 = vpack.c.bf16 %v37, %v36
    %v49 = vpack.c.bf16 %v39, %v38
    %v50 = vpack.c.bf16 %v41, %v40
    %v51 = vpack.c.bf16 %v43, %v42
    %v52 = vld [vmem:[%s1] sm:$0xf]
    %v53 = vld [vmem:[%s1 + $0x4] sm:$0xf]
    %v54 = vld [vmem:[%s1 + $0x8] sm:$0xf]
    %v55 = vld [vmem:[%s1 + $0xc] sm:$0xf]
    %v56 = vld [vmem:[%s1 + $0x10] sm:$0xf]
    %v57 = vld [vmem:[%s1 + $0x14] sm:$0xf]
    %v58 = vld [vmem:[%s1 + $0x18] sm:$0xf]
    %v59 = vld [vmem:[%s1 + $0x1c] sm:$0xf]
    %v60 = vld [vmem:[%s2] sm:$0xff]
    %v61 = vld [vmem:[%s2 + $0x8] sm:$0xff]
    %v62 = vld [vmem:[%s2 + $0x10] sm:$0xff]
    %v63 = vld [vmem:[%s2 + $0x18] sm:$0xff]
    %v64 = vld [vmem:[%s2 + $0x20] sm:$0xff]
    %v65 = vld [vmem:[%s2 + $0x28] sm:$0xff]
    %v66 = vld [vmem:[%s2 + $0x30] sm:$0xff]
    %v67 = vld [vmem:[%s2 + $0x38] sm:$0xff]
    %69 = vset.pattern.permute.xlu0 0
    %70 = vperm.xlu0 %69, %v60
    %v71 = vpop.permute.xlu0 %70
    %74 = vset.pattern.permute.xlu0 0
    %75 = vperm.xlu0 %74, %v61
    %v76 = vpop.permute.xlu0 %75
    %79 = vset.pattern.permute.xlu0 0
    %80 = vperm.xlu0 %79, %v62
    %v81 = vpop.permute.xlu0 %80
    %84 = vset.pattern.permute.xlu0 0
    %85 = vperm.xlu0 %84, %v63
    %v86 = vpop.permute.xlu0 %85
    %89 = vset.pattern.permute.xlu0 0
    %90 = vperm.xlu0 %89, %v64
    %v91 = vpop.permute.xlu0 %90
    %94 = vset.pattern.permute.xlu0 0
    %95 = vperm.xlu0 %94, %v65
    %v96 = vpop.permute.xlu0 %95
    %99 = vset.pattern.permute.xlu0 0
    %100 = vperm.xlu0 %99, %v66
    %v101 = vpop.permute.xlu0 %100
    %104 = vset.pattern.permute.xlu0 0
    %105 = vperm.xlu0 %104, %v67
    %v106 = vpop.permute.xlu0 %105
    %v116 = vunpack.c.l.b16 %v52
    %v117 = vunpack.c.l.b16 %v53
    %v118 = vunpack.c.l.b16 %v54
    %v119 = vunpack.c.l.b16 %v55
    %v120 = vunpack.c.l.b16 %v56
    %v121 = vunpack.c.l.b16 %v57
    %v122 = vunpack.c.l.b16 %v58
    %v123 = vunpack.c.l.b16 %v59
    %v124 = vpack.c.b16 %v117, %v116
    %v125 = vpack.c.b16 %v119, %v118
    %v126 = vpack.c.b16 %v121, %v120
    %v127 = vpack.c.b16 %v123, %v122
    %vm128 = vcmask 261120
    %v130 = vsel %vm128, %v124, 0
    %v133 = vsel %vm128, %v125, 0
    %v136 = vsel %vm128, %v126, 0
    %v139 = vsel %vm128, %v127, 0
    %v142 = vsel %vm128, %v44, 0
    %v145 = vsel %vm128, %v45, 0
    %v148 = vsel %vm128, %v46, 0
    %v151 = vsel %vm128, %v47, 0
    %v154 = vsel %vm128, %v48, 0
    %v157 = vsel %vm128, %v49, 0
    %v160 = vsel %vm128, %v50, 0
    %v163 = vsel %vm128, %v51, 0
    %165 = vmatprep.subr.bf16.mxu0 0
    %166 = vmatpush1.bf16.xpose.msra.mxu0 %v163
    %167 = vmatprep.subr.bf16.mxu0 0
    %168 = vmatpush1.bf16.xpose.msra.mxu0 %v160
    %169 = vmatprep.subr.bf16.mxu0 0
    %170 = vmatpush1.bf16.xpose.msra.mxu0 %v157
    %171 = vmatprep.subr.bf16.mxu0 0
    %172 = vmatpush1.bf16.xpose.msra.mxu0 %v154
    %173 = vmatprep.subr.bf16.mxu0 0
    %174 = vmatpush1.bf16.xpose.msra.mxu0 %v151
    %175 = vmatprep.subr.bf16.mxu0 0
    %176 = vmatpush1.bf16.xpose.msra.mxu0 %v148
    %177 = vmatprep.subr.bf16.mxu0 0
    %178 = vmatpush1.bf16.xpose.msra.mxu0 %v145
    %179 = vmatprep.subr.bf16.mxu0 0
    %180 = vmatpush1.bf16.xpose.msra.mxu0 %v142
    %181 = vmatprep.subr.bf16.mxu0 0
    %182 = vmatpush2.bf16.xpose.msra.mxu0 0
    %183 = vmatprep.subr.bf16.mxu0 0
    %184 = vmatpush2.bf16.xpose.msra.mxu0 0
    %185 = vmatprep.subr.bf16.mxu0 0
    %186 = vmatpush2.bf16.xpose.msra.mxu0 0
    %187 = vmatprep.subr.bf16.mxu0 0
    %188 = vmatpush2.bf16.xpose.msra.mxu0 0
    %189 = vmatprep.subr.bf16.mxu0 0
    %190 = vmatpush2.bf16.xpose.msra.mxu0 0
    %191 = vmatprep.subr.bf16.mxu0 0
    %192 = vmatpush2.bf16.xpose.msra.mxu0 0
    %193 = vmatprep.subr.bf16.mxu0 0
    %194 = vmatpush2.bf16.xpose.msra.mxu0 0
    %195 = vmatprep.subr.bf16.mxu0 0
    %196 = vmatpush2.bf16.xpose.msra.mxu0 0
    %197 = vmatprep.mubr.bf16.mxu0 0
    %198 = vmatmul.mubr.bf16.gmra.mxu0 %v130
    %v199 = vpop.f32.mrf.mxu0
    %v200 = vadd.f32 %v71, %v199
    %v201 = vpop.f32.mrf.mxu0
    %v202 = vpop.f32.mrf.mxu0
    %v203 = vadd.f32 %v76, %v202
    %v204 = vpop.f32.mrf.mxu0
    %205 = vmatprep.mubr.bf16.mxu0 0
    %206 = vmatmul.mubr.bf16.gmra.mxu0 %v133
    %v207 = vpop.f32.mrf.mxu0
    %v208 = vadd.f32 %v81, %v207
    %v209 = vpop.f32.mrf.mxu0
    %v210 = vpop.f32.mrf.mxu0
    %v211 = vadd.f32 %v86, %v210
    %v212 = vpop.f32.mrf.mxu0
    %213 = vmatprep.mubr.bf16.mxu0 0
    %214 = vmatmul.mubr.bf16.gmra.mxu0 %v136
    %v215 = vpop.f32.mrf.mxu0
    %v216 = vadd.f32 %v91, %v215
    %v217 = vpop.f32.mrf.mxu0
    %v218 = vpop.f32.mrf.mxu0
    %v219 = vadd.f32 %v96, %v218
    %v220 = vpop.f32.mrf.mxu0
    %221 = vmatprep.mubr.bf16.mxu0 0
    %222 = vmatmul.mubr.bf16.gmra.mxu0 %v139
    %v223 = vpop.f32.mrf.mxu0
    %v224 = vadd.f32 %v101, %v223
    %v225 = vpop.f32.mrf.mxu0
    %v226 = vpop.f32.mrf.mxu0
    %v227 = vadd.f32 %v106, %v226
    %v228 = vpop.f32.mrf.mxu0
    %229 = vdwg.mxu0
    %v230 = vmax.f32 %v200, 0.0
    %v231 = vmax.f32 %v203, 0.0
    %v232 = vmax.f32 %v208, 0.0
    %v233 = vmax.f32 %v211, 0.0
    %v234 = vmax.f32 %v216, 0.0
    %v235 = vmax.f32 %v219, 0.0
    %v236 = vmax.f32 %v224, 0.0
    %v237 = vmax.f32 %v227, 0.0
    %v238 = vpack.c.bf16 %v231, %v230
    %v239 = vpack.c.bf16 %v233, %v232
    %v240 = vpack.c.bf16 %v235, %v234
    %v241 = vpack.c.bf16 %v237, %v236
    %v242 = vld [vmem:[%s3] sm:$0xf]
    %v243 = vld [vmem:[%s3 + $0x4] sm:$0xf]
    %v244 = vld [vmem:[%s3 + $0x8] sm:$0xf]
    %v245 = vld [vmem:[%s3 + $0xc] sm:$0xf]
    %v246 = vld [vmem:[%s4] sm:$0xff]
    %v247 = vld [vmem:[%s4 + $0x8] sm:$0xff]
    %v248 = vld [vmem:[%s4 + $0x10] sm:$0xff]
    %v249 = vld [vmem:[%s4 + $0x18] sm:$0xff]
    %251 = vset.pattern.permute.xlu0 0
    %252 = vperm.xlu0 %251, %v246
    %v253 = vpop.permute.xlu0 %252
    %256 = vset.pattern.permute.xlu0 0
    %257 = vperm.xlu0 %256, %v247
    %v258 = vpop.permute.xlu0 %257
    %261 = vset.pattern.permute.xlu0 0
    %262 = vperm.xlu0 %261, %v248
    %v263 = vpop.permute.xlu0 %262
    %266 = vset.pattern.permute.xlu0 0
    %267 = vperm.xlu0 %266, %v249
    %v268 = vpop.permute.xlu0 %267
    %v274 = vunpack.c.l.b16 %v242
    %v275 = vunpack.c.l.b16 %v243
    %v276 = vunpack.c.l.b16 %v244
    %v277 = vunpack.c.l.b16 %v245
    %v278 = vpack.c.b16 %v275, %v274
    %v279 = vpack.c.b16 %v277, %v276
    %vm280 = vcmask 523264
    %v282 = vsel %vm280, %v278, 0
    %v285 = vsel %vm280, %v279, 0
    %287 = vmatprep.subr.bf16.mxu0 0
    %288 = vmatpush1.bf16.msra.mxu0 0
    %289 = vmatprep.subr.bf16.mxu0 0
    %290 = vmatpush1.bf16.msra.mxu0 0
    %291 = vmatprep.subr.bf16.mxu0 0
    %292 = vmatpush1.bf16.msra.mxu0 0
    %293 = vmatprep.subr.bf16.mxu0 0
    %294 = vmatpush1.bf16.msra.mxu0 0
    %295 = vmatprep.subr.bf16.mxu0 0
    %296 = vmatpush1.bf16.msra.mxu0 %v241
    %297 = vmatprep.subr.bf16.mxu0 0
    %298 = vmatpush1.bf16.msra.mxu0 %v240
    %299 = vmatprep.subr.bf16.mxu0 0
    %300 = vmatpush1.bf16.msra.mxu0 %v239
    %301 = vmatprep.subr.bf16.mxu0 0
    %302 = vmatpush1.bf16.msra.mxu0 %v238
    %303 = vmatprep.subr.bf16.mxu0 0
    %304 = vmatpush2.bf16.msra.mxu0 0
    %305 = vmatprep.subr.bf16.mxu0 0
    %306 = vmatpush2.bf16.msra.mxu0 0
    %307 = vmatprep.subr.bf16.mxu0 0
    %308 = vmatpush2.bf16.msra.mxu0 0
    %309 = vmatprep.subr.bf16.mxu0 0
    %310 = vmatpush2.bf16.msra.mxu0 0
    %311 = vmatprep.subr.bf16.mxu0 0
    %312 = vmatpush2.bf16.msra.mxu0 0
    %313 = vmatprep.subr.bf16.mxu0 0
    %314 = vmatpush2.bf16.msra.mxu0 0
    %315 = vmatprep.subr.bf16.mxu0 0
    %316 = vmatpush2.bf16.msra.mxu0 0
    %317 = vmatprep.subr.bf16.mxu0 0
    %318 = vmatpush2.bf16.msra.mxu0 0
    %319 = vmatprep.mubr.bf16.mxu0 0
    %320 = vmatmul.mubr.bf16.gmra.mxu0 %v282
    %v321 = vpop.f32.mrf.mxu0
    %v322 = vadd.f32 %v253, %v321
    %v323 = vpop.f32.mrf.mxu0
    %v324 = vpop.f32.mrf.mxu0
    %v325 = vadd.f32 %v258, %v324
    %v326 = vpop.f32.mrf.mxu0
    %327 = vmatprep.mubr.bf16.mxu0 0
    %328 = vmatmul.mubr.bf16.gmra.mxu0 %v285
    %v329 = vpop.f32.mrf.mxu0
    %v330 = vadd.f32 %v263, %v329
    %v331 = vpop.f32.mrf.mxu0
    %v332 = vpop.f32.mrf.mxu0
    %v333 = vadd.f32 %v268, %v332
    %v334 = vpop.f32.mrf.mxu0
    %335 = vdwg.mxu0
    %v336 = vmax.f32 %v322, 0.0
    %v337 = vmax.f32 %v325, 0.0
    %v338 = vmax.f32 %v330, 0.0
    %v339 = vmax.f32 %v333, 0.0
    %v340 = vpack.c.bf16 %v337, %v336
    %v341 = vpack.c.bf16 %v339, %v338
    %v342 = vld [vmem:[%s5] sm:$0x3]
    %v343 = vld [vmem:[%s6] sm:$0xf]
    %345 = vset.pattern.permute.xlu0 0
    %346 = vperm.xlu0 %345, %v343
    %v347 = vpop.permute.xlu0 %346
    %v350 = vsel %vm128, %v342, 0
    %352 = vmatprep.subr.bf16.mxu0 0
    %353 = vmatpush1.bf16.msra.mxu0 0
    %354 = vmatprep.subr.bf16.mxu0 0
    %355 = vmatpush1.bf16.msra.mxu0 0
    %356 = vmatprep.subr.bf16.mxu0 0
    %357 = vmatpush1.bf16.msra.mxu0 0
    %358 = vmatprep.subr.bf16.mxu0 0
    %359 = vmatpush1.bf16.msra.mxu0 0
    %360 = vmatprep.subr.bf16.mxu0 0
    %361 = vmatpush1.bf16.msra.mxu0 0
    %362 = vmatprep.subr.bf16.mxu0 0
    %363 = vmatpush1.bf16.msra.mxu0 0
    %364 = vmatprep.subr.bf16.mxu0 0
    %365 = vmatpush1.bf16.msra.mxu0 %v341
    %366 = vmatprep.subr.bf16.mxu0 0
    %367 = vmatpush1.bf16.msra.mxu0 %v340
    %368 = vmatprep.subr.bf16.mxu0 0
    %369 = vmatpush2.bf16.msra.mxu0 0
    %370 = vmatprep.subr.bf16.mxu0 0
    %371 = vmatpush2.bf16.msra.mxu0 0
    %372 = vmatprep.subr.bf16.mxu0 0
    %373 = vmatpush2.bf16.msra.mxu0 0
    %374 = vmatprep.subr.bf16.mxu0 0
    %375 = vmatpush2.bf16.msra.mxu0 0
    %376 = vmatprep.subr.bf16.mxu0 0
    %377 = vmatpush2.bf16.msra.mxu0 0
    %378 = vmatprep.subr.bf16.mxu0 0
    %379 = vmatpush2.bf16.msra.mxu0 0
    %380 = vmatprep.subr.bf16.mxu0 0
    %381 = vmatpush2.bf16.msra.mxu0 0
    %382 = vmatprep.subr.bf16.mxu0 0
    %383 = vmatpush2.bf16.msra.mxu0 0
    %384 = vmatprep.mubr.bf16.mxu0 0
    %385 = vmatmul.mubr.bf16.gmra.mxu0 %v350
    %v386 = vpop.f32.mrf.mxu0
    %v387 = vadd.f32 %v347, %v386
    %v388 = vpop.f32.mrf.mxu0
    %v389 = vpop.f32.mrf.mxu0
    %v390 = vpop.f32.mrf.mxu0
    %391 = vdwg.mxu0
    %392 = vst [vmem:[#allocation2] sm:$0xf] %v387
    // Predicated region
    $region30: #{tpu_custom_call.1} parent=1 // pred_check
      _
    $region31: #{tpu_custom_call.1} parent=1 // pred_check_branch
      %394 = sbr.rel (0) target = $region33
    $region32: #{tpu_custom_call.1} parent=1 // pred_region
      %s396 = ssub.s32 64, 64
      %397 = vsyncadd [#allocation3], %s396
      %s399 = sshll.u32 [#allocation2], 4
      %s400 = int_to_ptr.vmem [resolvable:$true] %s399
      %402 = dma.vmem_to_hbm [thread:$0]  %s400, 64, %s7, [#allocation3]
    $region33: #{tpu_custom_call.1} parent=1 // pred_fallthru
      _
    // Predicated region
    $region34: #{tpu_custom_call.1} parent=1 // pred_check
      _
    $region35: #{tpu_custom_call.1} parent=1 // pred_check_branch
      %404 = sbr.rel (0) target = $region37
    $region36: #{tpu_custom_call.1} parent=1 // pred_region
      %405 = dma.done [#allocation3], 64
    $region37: #{tpu_custom_call.1} parent=1 // pred_fallthru
      _
    %406 = vsyncpa [#allocation3], 1

</llo_original>
